<compile_context>
chip_gen: v5e
topology: v5e:2x2
jax: 0.10.0
libtpu: 0.0.40
codegen_flags: <defaults>
</compile_context>

<pallas_src>
import functools

import jax
import jax.numpy as jnp
from jax.experimental import pallas as pl
from jax.experimental.pallas import tpu as pltpu


LANE = 128


def _round_up(x, m):
    return (x + m - 1) // m * m


# ----------------------------------------------------------------------------
# Kernel
# ----------------------------------------------------------------------------
def _ensemble_critic_kernel(s_ref, a_ref, g_ref,
                            w1s_ref, w1a_ref, w1g_ref, b1_ref,
                            w2_ref, b2_ref,
                            w3_ref, b3_ref,
                            o_ref):
    """All n_Q critics fused; one batch tile per grid step.

    Ref shapes (Bt = batch tile, H1f/H2f/OUTW = 128-padded fused widths):
      s_ref:(Bt,S)  a_ref:(Bt,A)  g_ref:(Bt,S)                 (f32)
      w1s/w1a/w1g: row blocks of W1_all -> [S|A|S, H1f]         (bf16)
      w2_ref: block-diag (zero-padded) [H1f, H2f]               (bf16)
      w3_ref: block-diag (zero-padded) [H2f, OUTW]              (bf16)
      b1_ref:[1,H1f]  b2_ref:[1,H2f]  b3_ref:[1,OUTW]           (f32)
      o_ref : (Bt, OUTW)  -- lane-dense; real Q values in [:, :n_Q]
    """
    s = s_ref[...].astype(jnp.bfloat16)
    a = a_ref[...].astype(jnp.bfloat16)
    g = g_ref[...].astype(jnp.bfloat16)

    # Layer 1: all ensemble members at once; HBM concat replaced by a
    # row-split sum accumulated in f32.
    h1 = (jnp.dot(s, w1s_ref[...], preferred_element_type=jnp.float32)
          + jnp.dot(a, w1a_ref[...], preferred_element_type=jnp.float32)
          + jnp.dot(g, w1g_ref[...], preferred_element_type=jnp.float32)
          + b1_ref[...])
    h1 = jnp.maximum(h1, 0.0)

    # Layer 2: block-diagonal weights keep members independent but give one
    # wide MXU push instead of n_Q narrow ones.  Padded lanes stay exactly 0
    # (zero weights + zero bias + ReLU).
    h2 = jnp.dot(h1.astype(jnp.bfloat16), w2_ref[...],
                 preferred_element_type=jnp.float32) + b2_ref[...]
    h2 = jnp.maximum(h2, 0.0)

    # Output heads: block-diagonal [H2f, OUTW] -> lane-dense (Bt, OUTW) store.
    q = jnp.dot(h2.astype(jnp.bfloat16), w3_ref[...],
                preferred_element_type=jnp.float32) + b3_ref[...]

    o_ref[...] = q.astype(o_ref.dtype)


# ----------------------------------------------------------------------------
# Parameter packing (one-time, outside the forward)
# ----------------------------------------------------------------------------
def _block_diag(blocks):
    """[n, r, c] stacked blocks -> [n*r, n*c] block-diagonal matrix."""
    n, r, c = blocks.shape
    out = jnp.zeros((n * r, n * c), blocks.dtype)
    for q in range(n):
        out = out.at[q * r:(q + 1) * r, q * c:(q + 1) * c].set(blocks[q])
    return out


def pack_params(params, state_dim, action_dim):
    """Repack stacked per-member params into the fused, lane-padded layout."""
    n_Q, d_in, H1 = params["w1"].shape
    H2 = params["w2"].shape[2]
    assert d_in == 2 * state_dim + action_dim

    H1f = _round_up(n_Q * H1, LANE)
    H2f = _round_up(n_Q * H2, LANE)
    outw = _round_up(n_Q, LANE)          # lane-dense output width (>= 128)

    # [n_Q, D_in, H1] -> [D_in, n_Q*H1]; member q owns columns q*H1:(q+1)*H1.
    w1_all = jnp.transpose(params["w1"], (1, 0, 2)).reshape(d_in, n_Q * H1)
    w1_all = jnp.pad(w1_all, ((0, 0), (0, H1f - n_Q * H1)))
    w1s = w1_all[:state_dim]
    w1a = w1_all[state_dim:state_dim + action_dim]
    w1g = w1_all[state_dim + action_dim:]
    b1 = jnp.pad(jnp.transpose(params["b1"], (1, 0, 2)).reshape(1, n_Q * H1),
                 ((0, 0), (0, H1f - n_Q * H1)))

    w2 = jnp.pad(_block_diag(params["w2"]),                 # [H1f, H2f]
                 ((0, H1f - n_Q * H1), (0, H2f - n_Q * H2)))
    b2 = jnp.pad(jnp.transpose(params["b2"], (1, 0, 2)).reshape(1, n_Q * H2),
                 ((0, 0), (0, H2f - n_Q * H2)))

    w3 = jnp.pad(_block_diag(params["w3"]),                 # [H2f, outw]
                 ((0, H2f - n_Q * H2), (0, outw - n_Q)))
    b3 = jnp.pad(jnp.transpose(params["b3"], (1, 0, 2)).reshape(1, n_Q),
                 ((0, 0), (0, outw - n_Q)))

    bf16 = jnp.bfloat16
    return {
        "w1s": w1s.astype(bf16), "w1a": w1a.astype(bf16), "w1g": w1g.astype(bf16),
        "b1": b1.astype(jnp.float32),
        "w2": w2.astype(bf16), "b2": b2.astype(jnp.float32),
        "w3": w3.astype(bf16), "b3": b3.astype(jnp.float32),
    }


# ----------------------------------------------------------------------------
# Tiling / VMEM budget helpers
# ----------------------------------------------------------------------------
def _pick_batch_tile(B, block_b):
    """Small batches: one tile.  Large batches: >= 2 tiles so the 'parallel'
    grid axis can shard across both v7x TensorCores."""
    if B <= 128:
        return B
    bt = min(block_b, _round_up(pl.cdiv(B, 2), 8))
    return max(8, bt)


def _vmem_limit_bytes(bt, state_dim, action_dim, H1f, H2f, outw):
    pad = lambda n: _round_up(n, LANE)   # VMEM lane padding of narrow inputs
    f32, bf16 = 4, 2
    inputs = 2 * bt * (2 * pad(state_dim) + pad(action_dim)) * f32   # 2x buffered
    weights = ((2 * state_dim + action_dim) * H1f * bf16 + H1f * f32
               + H1f * H2f * bf16 + H2f * f32
               + H2f * outw * bf16 + outw * f32)                     # Buffered(1)
    out = 2 * bt * outw * f32                                        # 2x buffered
    inter = bt * (H1f + H2f) * (f32 + bf16)                          # h1/h2 + bf16 casts
    need = inputs + weights + out + inter
    # 2x headroom for compiler scratch/regalloc; clamp to sane bounds
    # (64 MiB = v7x physical VMEM per TensorCore).
    return int(min(max(2 * need + (2 << 20), 8 << 20), 64 << 20))


# ----------------------------------------------------------------------------
# Forward wrapper
# ----------------------------------------------------------------------------
@functools.partial(jax.jit, static_argnames=("n_Q", "block_b"))
def ensemble_critic_forward(state, action, goal, packed, n_Q, block_b=1024):
    """Pallas-backed EnsembleCritic forward.  Returns Q: [B, n_Q] (f32)."""
    B, state_dim = state.shape
    action_dim = action.shape[1]
    H1f = packed["w1s"].shape[1]
    H2f = packed["w2"].shape[1]
    outw = packed["w3"].shape[1]

    bt = _pick_batch_tile(B, block_b)
    grid = (pl.cdiv(B, bt),)

    resident = dict(pipeline_mode=pl.Buffered(1))   # constant-index weights
    in_specs = [
        pl.BlockSpec((bt, state_dim), lambda i: (i, 0)),
        pl.BlockSpec((bt, action_dim), lambda i: (i, 0)),
        pl.BlockSpec((bt, state_dim), lambda i: (i, 0)),
        # Weights/biases: full-array blocks, resident & single-buffered.
        pl.BlockSpec(packed["w1s"].shape, lambda i: (0, 0), **resident),
        pl.BlockSpec(packed["w1a"].shape, lambda i: (0, 0), **resident),
        pl.BlockSpec(packed["w1g"].shape, lambda i: (0, 0), **resident),
        pl.BlockSpec(packed["b1"].shape, lambda i: (0, 0), **resident),
        pl.BlockSpec(packed["w2"].shape, lambda i: (0, 0), **resident),
        pl.BlockSpec(packed["b2"].shape, lambda i: (0, 0), **resident),
        pl.BlockSpec(packed["w3"].shape, lambda i: (0, 0), **resident),
        pl.BlockSpec(packed["b3"].shape, lambda i: (0, 0), **resident),
    ]

    weight_bytes = sum(int(v.size) * v.dtype.itemsize for v in packed.values())
    flops = 2 * B * ((2 * state_dim + action_dim) * H1f + H1f * H2f + H2f * outw)
    bytes_accessed = (B * (2 * state_dim + action_dim) * 4
                      + weight_bytes + B * outw * 4)

    q_padded = pl.pallas_call(
        _ensemble_critic_kernel,
        out_shape=jax.ShapeDtypeStruct((B, outw), jnp.float32),
        grid=grid,
        in_specs=in_specs,
        out_specs=pl.BlockSpec((bt, outw), lambda i: (i, 0)),
        compiler_params=pltpu.CompilerParams(
            dimension_semantics=("parallel",),
            vmem_limit_bytes=_vmem_limit_bytes(
                bt, state_dim, action_dim, H1f, H2f, outw)),
        cost_estimate=pl.CostEstimate(
            flops=int(flops), transcendentals=0,
            bytes_accessed=int(bytes_accessed)),
    )(state, action, goal,
      packed["w1s"], packed["w1a"], packed["w1g"], packed["b1"],
      packed["w2"], packed["b2"], packed["w3"], packed["b3"])

    return q_padded[:, :n_Q]


# ----------------------------------------------------------------------------
# Synthetic params + pure-JAX reference (PyTorch-Linear-like semantics)
# ----------------------------------------------------------------------------
def init_params(key, state_dim, action_dim, hidden_dims, n_Q):
    d_in = 2 * state_dim + action_dim
    dims = [d_in] + list(hidden_dims) + [1]

    def linear(k, fan_in, fan_out):
        kw, kb = jax.random.split(k)
        bound = 1.0 / jnp.sqrt(jnp.float32(fan_in))
        w = jax.random.uniform(kw, (fan_in, fan_out), jnp.float32, -bound, bound)
        b = jax.random.uniform(kb, (1, fan_out), jnp.float32, -bound, bound)
        return w, b

    ws = {i: [] for i in range(len(dims) - 1)}
    bs = {i: [] for i in range(len(dims) - 1)}
    keys = jax.random.split(key, n_Q * (len(dims) - 1))
    ki = 0
    for _ in range(n_Q):
        for li in range(len(dims) - 1):
            w, b = linear(keys[ki], dims[li], dims[li + 1])
            ws[li].append(w)
            bs[li].append(b)
            ki += 1

    return {
        "w1": jnp.stack(ws[0]), "b1": jnp.stack(bs[0]),
        "w2": jnp.stack(ws[1]), "b2": jnp.stack(bs[1]),
        "w3": jnp.stack(ws[2]), "b3": jnp.stack(bs[2]),
    }


def reference_forward(state, action, goal, params):
    """Float32 per-member reference, matching the PyTorch module exactly."""
    x = jnp.concatenate([state, action, goal], axis=-1).astype(jnp.float32)
    qs = []
    for q in range(params["w1"].shape[0]):
        h = jnp.maximum(x @ params["w1"][q] + params["b1"][q], 0.0)
        h = jnp.maximum(h @ params["w2"][q] + params["b2"][q], 0.0)
        qs.append(h @ params["w3"][q] + params["b3"][q])
    return jnp.concatenate(qs, axis=-1)


if __name__ == "__main__":
    # Small shapes consistent with the module's forward.
    B = 8
    state_dim = 12
    action_dim = 8
    hidden_dims = [32, 32]
    n_Q = 2

    key = jax.random.PRNGKey(0)
    k_s, k_a, k_g, k_p = jax.random.split(key, 4)
    state = jax.random.normal(k_s, (B, state_dim), jnp.float32)
    action = jax.random.normal(k_a, (B, action_dim), jnp.float32)
    goal = jax.random.normal(k_g, (B, state_dim), jnp.float32)

    params = init_params(k_p, state_dim, action_dim, hidden_dims, n_Q)
    packed = pack_params(params, state_dim, action_dim)   # one-time repack

    q_out = ensemble_critic_forward(state, action, goal, packed, n_Q)
    jax.block_until_ready(q_out)

    q_ref = reference_forward(state, action, goal, params)
    assert q_out.shape == (B, n_Q), q_out.shape
    # Tolerance accounts for bf16 matmul inputs (f32 accumulation).
    assert jnp.allclose(q_out, q_ref, atol=2e-2, rtol=2e-2), (
        f"max abs diff {jnp.max(jnp.abs(q_out - q_ref))}")

    print("KERNEL_OK")
</pallas_src>

<mosaic_0001>
module attributes {stable_mosaic.version = 11 : i64} {
  func.func @_ensemble_critic_kernel(%arg0: i32, %arg1: memref<8x12xf32, #tpu.memory_space<vmem>>, %arg2: memref<8x8xf32, #tpu.memory_space<vmem>>, %arg3: memref<8x12xf32, #tpu.memory_space<vmem>>, %arg4: memref<12x128xbf16, #tpu.memory_space<vmem>>, %arg5: memref<8x128xbf16, #tpu.memory_space<vmem>>, %arg6: memref<12x128xbf16, #tpu.memory_space<vmem>>, %arg7: memref<1x128xf32, #tpu.memory_space<vmem>>, %arg8: memref<128x128xbf16, #tpu.memory_space<vmem>>, %arg9: memref<1x128xf32, #tpu.memory_space<vmem>>, %arg10: memref<128x128xbf16, #tpu.memory_space<vmem>>, %arg11: memref<1x128xf32, #tpu.memory_space<vmem>>, %arg12: memref<8x128xf32, #tpu.memory_space<vmem>>) attributes {dimension_semantics = [#tpu.dimension_semantics<parallel>], iteration_bounds = array<i64: 1>, scalar_prefetch = 0 : i64, scratch_operands = 0 : i64, tpu.core_type = #tpu.core_type<tc>, window_params = [{transform_indices = @transform_0, window_bounds = array<i64: 8, 12>}, {transform_indices = @transform_1, window_bounds = array<i64: 8, 8>}, {transform_indices = @transform_2, window_bounds = array<i64: 8, 12>}, {pipeline_mode = #tpu.pipeline_mode<synchronous>, transform_indices = @transform_3, window_bounds = array<i64: 12, 128>}, {pipeline_mode = #tpu.pipeline_mode<synchronous>, transform_indices = @transform_4, window_bounds = array<i64: 8, 128>}, {pipeline_mode = #tpu.pipeline_mode<synchronous>, transform_indices = @transform_5, window_bounds = array<i64: 12, 128>}, {pipeline_mode = #tpu.pipeline_mode<synchronous>, transform_indices = @transform_6, window_bounds = array<i64: 1, 128>}, {pipeline_mode = #tpu.pipeline_mode<synchronous>, transform_indices = @transform_7, window_bounds = array<i64: 128, 128>}, {pipeline_mode = #tpu.pipeline_mode<synchronous>, transform_indices = @transform_8, window_bounds = array<i64: 1, 128>}, {pipeline_mode = #tpu.pipeline_mode<synchronous>, transform_indices = @transform_9, window_bounds = array<i64: 128, 128>}, {pipeline_mode = #tpu.pipeline_mode<synchronous>, transform_indices = @transform_10, window_bounds = array<i64: 1, 128>}, {transform_indices = @transform_11, window_bounds = array<i64: 8, 128>}]} {
    %c0 = arith.constant 0 : index
    %c0_0 = arith.constant 0 : index
    %0 = vector.load %arg1[%c0, %c0_0] : memref<8x12xf32, #tpu.memory_space<vmem>>, vector<8x12xf32>
    %1 = arith.truncf %0 : vector<8x12xf32> to vector<8x12xbf16>
    %c0_1 = arith.constant 0 : index
    %c0_2 = arith.constant 0 : index
    %2 = vector.load %arg2[%c0_1, %c0_2] : memref<8x8xf32, #tpu.memory_space<vmem>>, vector<8x8xf32>
    %3 = arith.truncf %2 : vector<8x8xf32> to vector<8x8xbf16>
    %c0_3 = arith.constant 0 : index
    %c0_4 = arith.constant 0 : index
    %4 = vector.load %arg3[%c0_3, %c0_4] : memref<8x12xf32, #tpu.memory_space<vmem>>, vector<8x12xf32>
    %5 = arith.truncf %4 : vector<8x12xf32> to vector<8x12xbf16>
    %c0_5 = arith.constant 0 : index
    %c0_6 = arith.constant 0 : index
    %6 = vector.load %arg4[%c0_5, %c0_6] : memref<12x128xbf16, #tpu.memory_space<vmem>>, vector<12x128xbf16>
    %cst = arith.constant dense<0.000000e+00> : vector<8x128xf32>
    %7 = tpu.matmul %1, %6, %cst {dimension_numbers = #tpu.dot_dimension_numbers<[1], [0], [0], [1], [0, 0, 1, 1], [], []>} : vector<8x12xbf16>, vector<12x128xbf16>, vector<8x128xf32> -> vector<8x128xf32>
    %c0_7 = arith.constant 0 : index
    %c0_8 = arith.constant 0 : index
    %8 = vector.load %arg5[%c0_7, %c0_8] : memref<8x128xbf16, #tpu.memory_space<vmem>>, vector<8x128xbf16>
    %cst_9 = arith.constant dense<0.000000e+00> : vector<8x128xf32>
    %9 = tpu.matmul %3, %8, %cst_9 {dimension_numbers = #tpu.dot_dimension_numbers<[1], [0], [0], [1], [0, 0, 1, 1], [], []>} : vector<8x8xbf16>, vector<8x128xbf16>, vector<8x128xf32> -> vector<8x128xf32>
    %10 = arith.addf %7, %9 : vector<8x128xf32>
    %c0_10 = arith.constant 0 : index
    %c0_11 = arith.constant 0 : index
    %11 = vector.load %arg6[%c0_10, %c0_11] : memref<12x128xbf16, #tpu.memory_space<vmem>>, vector<12x128xbf16>
    %cst_12 = arith.constant dense<0.000000e+00> : vector<8x128xf32>
    %12 = tpu.matmul %5, %11, %cst_12 {dimension_numbers = #tpu.dot_dimension_numbers<[1], [0], [0], [1], [0, 0, 1, 1], [], []>} : vector<8x12xbf16>, vector<12x128xbf16>, vector<8x128xf32> -> vector<8x128xf32>
    %13 = arith.addf %10, %12 : vector<8x128xf32>
    %c0_13 = arith.constant 0 : index
    %c0_14 = arith.constant 0 : index
    %14 = vector.load %arg7[%c0_13, %c0_14] : memref<1x128xf32, #tpu.memory_space<vmem>>, vector<1x128xf32>
    %15 = vector.broadcast %14 : vector<1x128xf32> to vector<8x128xf32>
    %16 = arith.addf %13, %15 : vector<8x128xf32>
    %cst_15 = arith.constant 0.000000e+00 : f32
    %17 = vector.broadcast %cst_15 : f32 to vector<8x128xf32>
    %18 = arith.maximumf %16, %17 : vector<8x128xf32>
    %19 = arith.truncf %18 : vector<8x128xf32> to vector<8x128xbf16>
    %c0_16 = arith.constant 0 : index
    %c0_17 = arith.constant 0 : index
    %20 = vector.load %arg8[%c0_16, %c0_17] : memref<128x128xbf16, #tpu.memory_space<vmem>>, vector<128x128xbf16>
    %cst_18 = arith.constant dense<0.000000e+00> : vector<8x128xf32>
    %21 = tpu.matmul %19, %20, %cst_18 {dimension_numbers = #tpu.dot_dimension_numbers<[1], [0], [0], [1], [0, 0, 1, 1], [], []>} : vector<8x128xbf16>, vector<128x128xbf16>, vector<8x128xf32> -> vector<8x128xf32>
    %c0_19 = arith.constant 0 : index
    %c0_20 = arith.constant 0 : index
    %22 = vector.load %arg9[%c0_19, %c0_20] : memref<1x128xf32, #tpu.memory_space<vmem>>, vector<1x128xf32>
    %23 = vector.broadcast %22 : vector<1x128xf32> to vector<8x128xf32>
    %24 = arith.addf %21, %23 : vector<8x128xf32>
    %cst_21 = arith.constant 0.000000e+00 : f32
    %25 = vector.broadcast %cst_21 : f32 to vector<8x128xf32>
    %26 = arith.maximumf %24, %25 : vector<8x128xf32>
    %27 = arith.truncf %26 : vector<8x128xf32> to vector<8x128xbf16>
    %c0_22 = arith.constant 0 : index
    %c0_23 = arith.constant 0 : index
    %28 = vector.load %arg10[%c0_22, %c0_23] : memref<128x128xbf16, #tpu.memory_space<vmem>>, vector<128x128xbf16>
    %cst_24 = arith.constant dense<0.000000e+00> : vector<8x128xf32>
    %29 = tpu.matmul %27, %28, %cst_24 {dimension_numbers = #tpu.dot_dimension_numbers<[1], [0], [0], [1], [0, 0, 1, 1], [], []>} : vector<8x128xbf16>, vector<128x128xbf16>, vector<8x128xf32> -> vector<8x128xf32>
    %c0_25 = arith.constant 0 : index
    %c0_26 = arith.constant 0 : index
    %30 = vector.load %arg11[%c0_25, %c0_26] : memref<1x128xf32, #tpu.memory_space<vmem>>, vector<1x128xf32>
    %31 = vector.broadcast %30 : vector<1x128xf32> to vector<8x128xf32>
    %32 = arith.addf %29, %31 : vector<8x128xf32>
    %c0_27 = arith.constant 0 : index
    %c0_28 = arith.constant 0 : index
    %33 = vector.load %arg12[%c0_27, %c0_28] : memref<8x128xf32, #tpu.memory_space<vmem>>, vector<8x128xf32>
    tpu.vector_store %arg12[%c0_27, %c0_28], %32 {strides = array<i32>} : memref<8x128xf32, #tpu.memory_space<vmem>>, vector<8x128xf32>,
    return
  }
  func.func @transform_0(%arg0: i32) -> (i32, i32) {
    %c0_i32 = arith.constant 0 : i32
    %c0_i32_0 = arith.constant 0 : i32
    return %arg0, %c0_i32 : i32, i32
  }
  func.func @transform_1(%arg0: i32) -> (i32, i32) {
    %c0_i32 = arith.constant 0 : i32
    %c0_i32_0 = arith.constant 0 : i32
    return %arg0, %c0_i32 : i32, i32
  }
  func.func @transform_2(%arg0: i32) -> (i32, i32) {
    %c0_i32 = arith.constant 0 : i32
    %c0_i32_0 = arith.constant 0 : i32
    return %arg0, %c0_i32 : i32, i32
  }
  func.func @transform_3(%arg0: i32) -> (i32, i32) {
    %c0_i32 = arith.constant 0 : i32
    %c0_i32_0 = arith.constant 0 : i32
    %c0_i32_1 = arith.constant 0 : i32
    return %c0_i32, %c0_i32_0 : i32, i32
  }
  func.func @transform_4(%arg0: i32) -> (i32, i32) {
    %c0_i32 = arith.constant 0 : i32
    %c0_i32_0 = arith.constant 0 : i32
    %c0_i32_1 = arith.constant 0 : i32
    return %c0_i32, %c0_i32_0 : i32, i32
  }
  func.func @transform_5(%arg0: i32) -> (i32, i32) {
    %c0_i32 = arith.constant 0 : i32
    %c0_i32_0 = arith.constant 0 : i32
    %c0_i32_1 = arith.constant 0 : i32
    return %c0_i32, %c0_i32_0 : i32, i32
  }
  func.func @transform_6(%arg0: i32) -> (i32, i32) {
    %c0_i32 = arith.constant 0 : i32
    %c0_i32_0 = arith.constant 0 : i32
    %c0_i32_1 = arith.constant 0 : i32
    return %c0_i32, %c0_i32_0 : i32, i32
  }
  func.func @transform_7(%arg0: i32) -> (i32, i32) {
    %c0_i32 = arith.constant 0 : i32
    %c0_i32_0 = arith.constant 0 : i32
    %c0_i32_1 = arith.constant 0 : i32
    return %c0_i32, %c0_i32_0 : i32, i32
  }
  func.func @transform_8(%arg0: i32) -> (i32, i32) {
    %c0_i32 = arith.constant 0 : i32
    %c0_i32_0 = arith.constant 0 : i32
    %c0_i32_1 = arith.constant 0 : i32
    return %c0_i32, %c0_i32_0 : i32, i32
  }
  func.func @transform_9(%arg0: i32) -> (i32, i32) {
    %c0_i32 = arith.constant 0 : i32
    %c0_i32_0 = arith.constant 0 : i32
    %c0_i32_1 = arith.constant 0 : i32
    return %c0_i32, %c0_i32_0 : i32, i32
  }
  func.func @transform_10(%arg0: i32) -> (i32, i32) {
    %c0_i32 = arith.constant 0 : i32
    %c0_i32_0 = arith.constant 0 : i32
    %c0_i32_1 = arith.constant 0 : i32
    return %c0_i32, %c0_i32_0 : i32, i32
  }
  func.func @transform_11(%arg0: i32) -> (i32, i32) {
    %c0_i32 = arith.constant 0 : i32
    %c0_i32_0 = arith.constant 0 : i32
    return %arg0, %c0_i32 : i32, i32
  }
}

</mosaic_0001>

<llo_original>
// kernel: ensemble_critic_forward.1
$region0: #{ensemble_critic_forward.1}
  #allocation0 [shape = 'u32[]', space=smem, size = 0x4, offset = 0x4, fixed_abs, tag = 'smem constant byte address 0x4 - core index']
  #allocation1 [shape = 'u32[72,128]{1,0:T(1,128)}', space=vmem, size = 0x9000, scoped, tag = 'internal scratch']
  %s0 = inlined_call_operand.hbm [shape: f32[8,12], index: 0, kind: input, shape index: {}]
  %s1 = inlined_call_operand.hbm [shape: f32[8,8], index: 1, kind: input, shape index: {}]
  %s2 = inlined_call_operand.hbm [shape: f32[8,12], index: 2, kind: input, shape index: {}]
  %s3 = inlined_call_operand.hbm [shape: bf16[12,128], index: 3, kind: input, shape index: {}]
  %s4 = inlined_call_operand.vmem [shape: bf16[8,128], index: 4, kind: input, shape index: {}]
  %s5 = inlined_call_operand.hbm [shape: bf16[12,128], index: 5, kind: input, shape index: {}]
  %s6 = inlined_call_operand.vmem [shape: f32[1,128], index: 6, kind: input, shape index: {}]
  %s7 = inlined_call_operand.hbm [shape: bf16[128,128], index: 7, kind: input, shape index: {}]
  %s8 = inlined_call_operand.hbm [shape: f32[1,128], index: 8, kind: input, shape index: {}]
  %s9 = inlined_call_operand.hbm [shape: bf16[128,128], index: 9, kind: input, shape index: {}]
  %s10 = inlined_call_operand.hbm [shape: f32[1,128], index: 10, kind: input, shape index: {}]
  %s11 = inlined_call_operand.vmem [shape: f32[8,128], index: 11, kind: output, shape index: {}]
  %s12 = sld [smem:[#allocation0]]
  $region90: #{ensemble_critic_forward.1} parent=0
    _
  %s14 = ssub.s32 1, %s12
  %s15 = scalar_select 0, %s14, %s12
  $region1: #{ensemble_critic_forward.1} parent=0
    #allocation2 [shape = 'u8[4096]{0}', space=vmem, size = 0x1000, scoped, tag = 'input window, operand 0, single buffered']
    #allocation3 [shape = 's32[1]{0}', space=sflag, size = 0x4, scoped, tag = 'scoped memory for ensemble_critic_forward.1']
    #allocation4 [shape = 'u8[4096]{0}', space=vmem, size = 0x1000, scoped, tag = 'input window, operand 1, single buffered']
    #allocation5 [shape = 's32[1]{0}', space=sflag, size = 0x4, scoped, tag = 'scoped memory for ensemble_critic_forward.1']
    #allocation6 [shape = 'u8[4096]{0}', space=vmem, size = 0x1000, scoped, tag = 'input window, operand 2, single buffered']
    #allocation7 [shape = 'u8[4096]{0}', space=vmem, size = 0x1000, scoped, tag = 'input window, operand 3, single buffered']
    #allocation8 [shape = 's32[1]{0}', space=sflag, size = 0x4, scoped, tag = 'scoped memory for ensemble_critic_forward.1']
    #allocation9 [shape = 'u8[4096]{0}', space=vmem, size = 0x1000, scoped, tag = 'input window, operand 5, single buffered']
    #allocation10 [shape = 'u8[32768]{0}', space=vmem, size = 0x8000, scoped, tag = 'input window, operand 7, single buffered']
    #allocation11 [shape = 's32[1]{0}', space=sflag, size = 0x4, scoped, tag = 'scoped memory for ensemble_critic_forward.1']
    #allocation12 [shape = 'u8[512]{0}', space=vmem, size = 0x400, scoped, tag = 'input window, operand 8, single buffered']
    #allocation13 [shape = 'u8[32768]{0}', space=vmem, size = 0x8000, scoped, tag = 'input window, operand 9, single buffered']
    #allocation14 [shape = 's32[1]{0}', space=sflag, size = 0x4, scoped, tag = 'scoped memory for ensemble_critic_forward.1']
    #allocation15 [shape = 'u8[512]{0}', space=vmem, size = 0x400, scoped, tag = 'input window, operand 10, single buffered']
    %16 = vsyncpa [#allocation3], 0
    %17 = vsyncpa [#allocation5], 0
    %18 = vsyncpa [#allocation8], 0
    %19 = vsyncpa [#allocation11], 0
    %20 = vsyncpa [#allocation14], 0
    // Predicated region
    $region2: #{ensemble_critic_forward.1} parent=1 // pred_check
      _
    $region3: #{ensemble_critic_forward.1} parent=1 // pred_check_branch
      %22 = sbr.rel (0) target = $region5
    $region4: #{ensemble_critic_forward.1} parent=1 // pred_region
      %24 = vsyncadd [#allocation3], 0
      %s26 = sshll.u32 %s0, 4
      %s27 = int_to_ptr.hbm [resolvable:$true] %s26
      %s28 = sshll.u32 [#allocation2], 4
      %s29 = int_to_ptr.vmem [resolvable:$true] %s28
      %31 = dma.hbm_to_vmem [thread:$0]  %s27, 128, %s29, [#allocation3]
    $region5: #{ensemble_critic_forward.1} parent=1 // pred_fallthru
      _
    // Predicated region
    $region6: #{ensemble_critic_forward.1} parent=1 // pred_check
      _
    $region7: #{ensemble_critic_forward.1} parent=1 // pred_check_branch
      %33 = sbr.rel (0) target = $region9
    $region8: #{ensemble_critic_forward.1} parent=1 // pred_region
      %35 = vsyncadd [#allocation5], 0
      %s37 = sshll.u32 %s1, 4
      %s38 = int_to_ptr.hbm [resolvable:$true] %s37
      %s39 = sshll.u32 [#allocation4], 4
      %s40 = int_to_ptr.vmem [resolvable:$true] %s39
      %42 = dma.hbm_to_vmem [thread:$0]  %s38, 128, %s40, [#allocation5]
    $region9: #{ensemble_critic_forward.1} parent=1 // pred_fallthru
      _
    // Predicated region
    $region10: #{ensemble_critic_forward.1} parent=1 // pred_check
      _
    $region11: #{ensemble_critic_forward.1} parent=1 // pred_check_branch
      %44 = sbr.rel (0) target = $region13
    $region12: #{ensemble_critic_forward.1} parent=1 // pred_region
      %46 = vsyncadd [#allocation5], 0
      %s48 = sshll.u32 %s2, 4
      %s49 = int_to_ptr.hbm [resolvable:$true] %s48
      %s50 = sshll.u32 [#allocation6], 4
      %s51 = int_to_ptr.vmem [resolvable:$true] %s50
      %53 = dma.hbm_to_vmem [thread:$0]  %s49, 128, %s51, [#allocation5]
    $region13: #{ensemble_critic_forward.1} parent=1 // pred_fallthru
      _
    // Predicated region
    $region14: #{ensemble_critic_forward.1} parent=1 // pred_check
      _
    $region15: #{ensemble_critic_forward.1} parent=1 // pred_check_branch
      %55 = sbr.rel (0) target = $region17
    $region16: #{ensemble_critic_forward.1} parent=1 // pred_region
      %57 = vsyncadd [#allocation8], 0
      %s58 = sshll.u32 %s3, 4
      %s59 = int_to_ptr.hbm [resolvable:$true] %s58
      %s60 = sshll.u32 [#allocation7], 4
      %s61 = int_to_ptr.vmem [resolvable:$true] %s60
      %66 = dma.hbm_to_vmem [thread:$0]  %s59, 128, %s61, [#allocation8], 64, 64, 4
    $region17: #{ensemble_critic_forward.1} parent=1 // pred_fallthru
      _
    // Predicated region
    $region18: #{ensemble_critic_forward.1} parent=1 // pred_check
      _
    $region19: #{ensemble_critic_forward.1} parent=1 // pred_check_branch
      %68 = sbr.rel (0) target = $region21
    $region20: #{ensemble_critic_forward.1} parent=1 // pred_region
      _
    $region21: #{ensemble_critic_forward.1} parent=1 // pred_fallthru
      _
    // Predicated region
    $region22: #{ensemble_critic_forward.1} parent=1 // pred_check
      _
    $region23: #{ensemble_critic_forward.1} parent=1 // pred_check_branch
      %70 = sbr.rel (0) target = $region25
    $region24: #{ensemble_critic_forward.1} parent=1 // pred_region
      %72 = vsyncadd [#allocation8], 0
      %s73 = sshll.u32 %s5, 4
      %s74 = int_to_ptr.hbm [resolvable:$true] %s73
      %s75 = sshll.u32 [#allocation9], 4
      %s76 = int_to_ptr.vmem [resolvable:$true] %s75
      %81 = dma.hbm_to_vmem [thread:$0]  %s74, 128, %s76, [#allocation8], 64, 64, 4
    $region25: #{ensemble_critic_forward.1} parent=1 // pred_fallthru
      _
    // Predicated region
    $region26: #{ensemble_critic_forward.1} parent=1 // pred_check
      _
    $region27: #{ensemble_critic_forward.1} parent=1 // pred_check_branch
      %83 = sbr.rel (0) target = $region29
    $region28: #{ensemble_critic_forward.1} parent=1 // pred_region
      _
    $region29: #{ensemble_critic_forward.1} parent=1 // pred_fallthru
      _
    // Predicated region
    $region30: #{ensemble_critic_forward.1} parent=1 // pred_check
      _
    $region31: #{ensemble_critic_forward.1} parent=1 // pred_check_branch
      %85 = sbr.rel (0) target = $region33
    $region32: #{ensemble_critic_forward.1} parent=1 // pred_region
      %87 = vsyncadd [#allocation11], 0
      %s88 = sshll.u32 %s7, 4
      %s89 = int_to_ptr.hbm [resolvable:$true] %s88
      %s90 = sshll.u32 [#allocation10], 4
      %s91 = int_to_ptr.vmem [resolvable:$true] %s90
      %96 = dma.hbm_to_vmem [thread:$0]  %s89, 1024, %s91, [#allocation11], 64, 64, 4
    $region33: #{ensemble_critic_forward.1} parent=1 // pred_fallthru
      _
    // Predicated region
    $region34: #{ensemble_critic_forward.1} parent=1 // pred_check
      _
    $region35: #{ensemble_critic_forward.1} parent=1 // pred_check_branch
      %98 = sbr.rel (0) target = $region37
    $region36: #{ensemble_critic_forward.1} parent=1 // pred_region
      %100 = vsyncadd [#allocation11], 0
      %s102 = sshll.u32 %s8, 4
      %s103 = int_to_ptr.hbm [resolvable:$true] %s102
      %s104 = sshll.u32 [#allocation12], 4
      %s105 = int_to_ptr.vmem [resolvable:$true] %s104
      %107 = dma.hbm_to_vmem [thread:$0]  %s103, 16, %s105, [#allocation11]
    $region37: #{ensemble_critic_forward.1} parent=1 // pred_fallthru
      _
    // Predicated region
    $region38: #{ensemble_critic_forward.1} parent=1 // pred_check
      _
    $region39: #{ensemble_critic_forward.1} parent=1 // pred_check_branch
      %109 = sbr.rel (0) target = $region41
    $region40: #{ensemble_critic_forward.1} parent=1 // pred_region
      %111 = vsyncadd [#allocation14], 0
      %s112 = sshll.u32 %s9, 4
      %s113 = int_to_ptr.hbm [resolvable:$true] %s112
      %s114 = sshll.u32 [#allocation13], 4
      %s115 = int_to_ptr.vmem [resolvable:$true] %s114
      %120 = dma.hbm_to_vmem [thread:$0]  %s113, 1024, %s115, [#allocation14], 64, 64, 4
    $region41: #{ensemble_critic_forward.1} parent=1 // pred_fallthru
      _
    // Predicated region
    $region42: #{ensemble_critic_forward.1} parent=1 // pred_check
      _
    $region43: #{ensemble_critic_forward.1} parent=1 // pred_check_branch
      %122 = sbr.rel (0) target = $region45
    $region44: #{ensemble_critic_forward.1} parent=1 // pred_region
      %124 = vsyncadd [#allocation14], 0
      %s126 = sshll.u32 %s10, 4
      %s127 = int_to_ptr.hbm [resolvable:$true] %s126
      %s128 = sshll.u32 [#allocation15], 4
      %s129 = int_to_ptr.vmem [resolvable:$true] %s128
      %131 = dma.hbm_to_vmem [thread:$0]  %s127, 16, %s129, [#allocation14]
    $region45: #{ensemble_critic_forward.1} parent=1 // pred_fallthru
      _
    // Predicated region
    $region46: #{ensemble_critic_forward.1} parent=1 // pred_check
      _
    $region47: #{ensemble_critic_forward.1} parent=1 // pred_check_branch
      %133 = sbr.rel (0) target = $region49
    $region48: #{ensemble_critic_forward.1} parent=1 // pred_region
      %135 = dma.done [#allocation3], 128
    $region49: #{ensemble_critic_forward.1} parent=1 // pred_fallthru
      _
    // Predicated region
    $region50: #{ensemble_critic_forward.1} parent=1 // pred_check
      _
    $region51: #{ensemble_critic_forward.1} parent=1 // pred_check_branch
      %137 = sbr.rel (0) target = $region53
    $region52: #{ensemble_critic_forward.1} parent=1 // pred_region
      %139 = dma.done [#allocation5], 128
    $region53: #{ensemble_critic_forward.1} parent=1 // pred_fallthru
      _
    // Predicated region
    $region54: #{ensemble_critic_forward.1} parent=1 // pred_check
      _
    $region55: #{ensemble_critic_forward.1} parent=1 // pred_check_branch
      %141 = sbr.rel (0) target = $region57
    $region56: #{ensemble_critic_forward.1} parent=1 // pred_region
      %143 = dma.done [#allocation5], 128
    $region57: #{ensemble_critic_forward.1} parent=1 // pred_fallthru
      _
    // Predicated region
    $region58: #{ensemble_critic_forward.1} parent=1 // pred_check
      _
    $region59: #{ensemble_critic_forward.1} parent=1 // pred_check_branch
      %145 = sbr.rel (0) target = $region61
    $region60: #{ensemble_critic_forward.1} parent=1 // pred_region
      %147 = dma.done [#allocation8], 128
    $region61: #{ensemble_critic_forward.1} parent=1 // pred_fallthru
      _
    // Predicated region
    $region62: #{ensemble_critic_forward.1} parent=1 // pred_check
      _
    $region63: #{ensemble_critic_forward.1} parent=1 // pred_check_branch
      %149 = sbr.rel (0) target = $region65
    $region64: #{ensemble_critic_forward.1} parent=1 // pred_region
      %151 = dma.done [#allocation8], 128
    $region65: #{ensemble_critic_forward.1} parent=1 // pred_fallthru
      _
    // Predicated region
    $region66: #{ensemble_critic_forward.1} parent=1 // pred_check
      _
    $region67: #{ensemble_critic_forward.1} parent=1 // pred_check_branch
      %153 = sbr.rel (0) target = $region69
    $region68: #{ensemble_critic_forward.1} parent=1 // pred_region
      %155 = dma.done [#allocation11], 1024
    $region69: #{ensemble_critic_forward.1} parent=1 // pred_fallthru
      _
    // Predicated region
    $region70: #{ensemble_critic_forward.1} parent=1 // pred_check
      _
    $region71: #{ensemble_critic_forward.1} parent=1 // pred_check_branch
      %157 = sbr.rel (0) target = $region73
    $region72: #{ensemble_critic_forward.1} parent=1 // pred_region
      %159 = dma.done [#allocation11], 16
    $region73: #{ensemble_critic_forward.1} parent=1 // pred_fallthru
      _
    // Predicated region
    $region74: #{ensemble_critic_forward.1} parent=1 // pred_check
      _
    $region75: #{ensemble_critic_forward.1} parent=1 // pred_check_branch
      %161 = sbr.rel (0) target = $region77
    $region76: #{ensemble_critic_forward.1} parent=1 // pred_region
      %163 = dma.done [#allocation14], 1024
    $region77: #{ensemble_critic_forward.1} parent=1 // pred_fallthru
      _
    // Predicated region
    $region78: #{ensemble_critic_forward.1} parent=1 // pred_check
      _
    $region79: #{ensemble_critic_forward.1} parent=1 // pred_check_branch
      %165 = sbr.rel (0) target = $region81
    $region80: #{ensemble_critic_forward.1} parent=1 // pred_region
      %167 = dma.done [#allocation14], 16
    $region81: #{ensemble_critic_forward.1} parent=1 // pred_fallthru
      _
    %v169 = vld [vmem:[#allocation2] sm:$0xff]
    %v170 = vpack.c.bf16 %v169, %v169
    %v171 = vld [vmem:[#allocation4] sm:$0xff]
    %v172 = vpack.c.bf16 %v171, %v171
    %v173 = vld [vmem:[#allocation6] sm:$0xff]
    %v174 = vpack.c.bf16 %v173, %v173
    %v175 = vld [vmem:[#allocation7] sm:$0xf]
    %v176 = vld [vmem:[#allocation7 + $0x4] sm:$0x3]
    %v177 = vld [vmem:[%s4] sm:$0xf]
    %vm178 = vcmask 64512
    %v180 = vsel %vm178, %v172, 0
    %vm182 = vcmask 1043456
    %v184 = vsel %vm182, %v177, 0
    %186 = vmatpush.bf16.msra.mxu0 0
    %187 = vmatpush.bf16.msra.mxu0 0
    %188 = vmatpush.bf16.msra.mxu0 0
    %189 = vmatpush.bf16.msra.mxu0 0
    %190 = vmatpush.bf16.msra.mxu0 0
    %191 = vmatpush.bf16.msra.mxu0 0
    %192 = vmatpush.bf16.msra.mxu0 0
    %193 = vmatpush.bf16.msra.mxu0 %v184
    %194 = vmatmul.bf16.gmra.mxu0 %v180
    %v195 = vpop.f32.mrf.mxu0
    %v196 = vadd.f32 0.0, %v195
    %v197 = vpop.f32.mrf.mxu0
    %198 = vdwg.mxu0
    %v201 = vunpack.c.l.b16 %v175
    %v202 = vunpack.c.l.b16 %v176
    %v203 = vpack.c.b16 %v202, %v201
    %vm204 = vcmask 97280
    %v206 = vsel %vm204, %v170, 0
    %vm208 = vcmask 1045504
    %v210 = vsel %vm208, %v203, 0
    %212 = vmatpush.bf16.msra.mxu0 0
    %213 = vmatpush.bf16.msra.mxu0 0
    %214 = vmatpush.bf16.msra.mxu0 0
    %215 = vmatpush.bf16.msra.mxu0 0
    %216 = vmatpush.bf16.msra.mxu0 0
    %217 = vmatpush.bf16.msra.mxu0 0
    %218 = vmatpush.bf16.msra.mxu0 0
    %219 = vmatpush.bf16.msra.mxu0 %v210
    %220 = vmatmul.bf16.gmra.mxu0 %v206
    %v221 = vpop.f32.mrf.mxu0
    %v222 = vadd.f32 %v196, %v221
    %v223 = vpop.f32.mrf.mxu0
    %224 = vdwg.mxu0
    %v225 = vld [vmem:[#allocation9] sm:$0xf]
    %v226 = vld [vmem:[#allocation9 + $0x4] sm:$0x3]
    %v229 = vunpack.c.l.b16 %v225
    %v230 = vunpack.c.l.b16 %v226
    %v231 = vpack.c.b16 %v230, %v229
    %v233 = vsel %vm204, %v174, 0
    %v236 = vsel %vm208, %v231, 0
    %238 = vmatpush.bf16.msra.mxu0 0
    %239 = vmatpush.bf16.msra.mxu0 0
    %240 = vmatpush.bf16.msra.mxu0 0
    %241 = vmatpush.bf16.msra.mxu0 0
    %242 = vmatpush.bf16.msra.mxu0 0
    %243 = vmatpush.bf16.msra.mxu0 0
    %244 = vmatpush.bf16.msra.mxu0 0
    %245 = vmatpush.bf16.msra.mxu0 %v236
    %246 = vmatmul.bf16.gmra.mxu0 %v233
    %v247 = vpop.f32.mrf.mxu0
    %v248 = vadd.f32 0.0, %v247
    %v249 = vpop.f32.mrf.mxu0
    %250 = vdwg.mxu0
    %v251 = vadd.f32 %v222, %v248
    %v252 = vld [vmem:[%s6] sm:$0x1]
    %v254 = vperm.slane %v252, 0
    %v256 = vadd.f32 %v251, %v254
    %v257 = vmax.f32 %v256, 0.0
    %v258 = vpack.c.bf16 %v257, %v257
    %v259 = vld [vmem:[#allocation10] sm:$0xf]
    %v260 = vld [vmem:[#allocation10 + $0x4] sm:$0xf]
    %v261 = vld [vmem:[#allocation10 + $0x8] sm:$0xf]
    %v262 = vld [vmem:[#allocation10 + $0xc] sm:$0xf]
    %v263 = vld [vmem:[#allocation10 + $0x10] sm:$0xf]
    %v264 = vld [vmem:[#allocation10 + $0x14] sm:$0xf]
    %v265 = vld [vmem:[#allocation10 + $0x18] sm:$0xf]
    %v266 = vld [vmem:[#allocation10 + $0x1c] sm:$0xf]
    %v267 = vld [vmem:[#allocation10 + $0x20] sm:$0xf]
    %v268 = vld [vmem:[#allocation10 + $0x24] sm:$0xf]
    %v269 = vld [vmem:[#allocation10 + $0x28] sm:$0xf]
    %v270 = vld [vmem:[#allocation10 + $0x2c] sm:$0xf]
    %v271 = vld [vmem:[#allocation10 + $0x30] sm:$0xf]
    %v272 = vld [vmem:[#allocation10 + $0x34] sm:$0xf]
    %v273 = vld [vmem:[#allocation10 + $0x38] sm:$0xf]
    %v274 = vld [vmem:[#allocation10 + $0x3c] sm:$0xf]
    %v275 = vld [vmem:[#allocation12] sm:$0x1]
    %v277 = vperm.slane %v275, 0
    %v295 = vunpack.c.l.b16 %v259
    %v296 = vunpack.c.l.b16 %v260
    %v297 = vunpack.c.l.b16 %v261
    %v298 = vunpack.c.l.b16 %v262
    %v299 = vunpack.c.l.b16 %v263
    %v300 = vunpack.c.l.b16 %v264
    %v301 = vunpack.c.l.b16 %v265
    %v302 = vunpack.c.l.b16 %v266
    %v303 = vunpack.c.l.b16 %v267
    %v304 = vunpack.c.l.b16 %v268
    %v305 = vunpack.c.l.b16 %v269
    %v306 = vunpack.c.l.b16 %v270
    %v307 = vunpack.c.l.b16 %v271
    %v308 = vunpack.c.l.b16 %v272
    %v309 = vunpack.c.l.b16 %v273
    %v310 = vunpack.c.l.b16 %v274
    %v311 = vpack.c.b16 %v296, %v295
    %v312 = vpack.c.b16 %v298, %v297
    %v313 = vpack.c.b16 %v300, %v299
    %v314 = vpack.c.b16 %v302, %v301
    %v315 = vpack.c.b16 %v304, %v303
    %v316 = vpack.c.b16 %v306, %v305
    %v317 = vpack.c.b16 %v308, %v307
    %v318 = vpack.c.b16 %v310, %v309
    %327 = vmatpush.bf16.msra.mxu0 %v318
    %328 = vmatpush.bf16.msra.mxu0 %v317
    %329 = vmatpush.bf16.msra.mxu0 %v316
    %330 = vmatpush.bf16.msra.mxu0 %v315
    %331 = vmatpush.bf16.msra.mxu0 %v314
    %332 = vmatpush.bf16.msra.mxu0 %v313
    %333 = vmatpush.bf16.msra.mxu0 %v312
    %334 = vmatpush.bf16.msra.mxu0 %v311
    %335 = vmatmul.bf16.gmra.mxu0 %v258
    %v336 = vpop.f32.mrf.mxu0
    %v337 = vadd.f32 %v277, %v336
    %v338 = vpop.f32.mrf.mxu0
    %339 = vdwg.mxu0
    %v340 = vmax.f32 %v337, 0.0
    %v341 = vpack.c.bf16 %v340, %v340
    %v342 = vld [vmem:[#allocation13] sm:$0xf]
    %v343 = vld [vmem:[#allocation13 + $0x4] sm:$0xf]
    %v344 = vld [vmem:[#allocation13 + $0x8] sm:$0xf]
    %v345 = vld [vmem:[#allocation13 + $0xc] sm:$0xf]
    %v346 = vld [vmem:[#allocation13 + $0x10] sm:$0xf]
    %v347 = vld [vmem:[#allocation13 + $0x14] sm:$0xf]
    %v348 = vld [vmem:[#allocation13 + $0x18] sm:$0xf]
    %v349 = vld [vmem:[#allocation13 + $0x1c] sm:$0xf]
    %v350 = vld [vmem:[#allocation13 + $0x20] sm:$0xf]
    %v351 = vld [vmem:[#allocation13 + $0x24] sm:$0xf]
    %v352 = vld [vmem:[#allocation13 + $0x28] sm:$0xf]
    %v353 = vld [vmem:[#allocation13 + $0x2c] sm:$0xf]
    %v354 = vld [vmem:[#allocation13 + $0x30] sm:$0xf]
    %v355 = vld [vmem:[#allocation13 + $0x34] sm:$0xf]
    %v356 = vld [vmem:[#allocation13 + $0x38] sm:$0xf]
    %v357 = vld [vmem:[#allocation13 + $0x3c] sm:$0xf]
    %v358 = vld [vmem:[#allocation15] sm:$0x1]
    %v360 = vperm.slane %v358, 0
    %v378 = vunpack.c.l.b16 %v342
    %v379 = vunpack.c.l.b16 %v343
    %v380 = vunpack.c.l.b16 %v344
    %v381 = vunpack.c.l.b16 %v345
    %v382 = vunpack.c.l.b16 %v346
    %v383 = vunpack.c.l.b16 %v347
    %v384 = vunpack.c.l.b16 %v348
    %v385 = vunpack.c.l.b16 %v349
    %v386 = vunpack.c.l.b16 %v350
    %v387 = vunpack.c.l.b16 %v351
    %v388 = vunpack.c.l.b16 %v352
    %v389 = vunpack.c.l.b16 %v353
    %v390 = vunpack.c.l.b16 %v354
    %v391 = vunpack.c.l.b16 %v355
    %v392 = vunpack.c.l.b16 %v356
    %v393 = vunpack.c.l.b16 %v357
    %v394 = vpack.c.b16 %v379, %v378
    %v395 = vpack.c.b16 %v381, %v380
    %v396 = vpack.c.b16 %v383, %v382
    %v397 = vpack.c.b16 %v385, %v384
    %v398 = vpack.c.b16 %v387, %v386
    %v399 = vpack.c.b16 %v389, %v388
    %v400 = vpack.c.b16 %v391, %v390
    %v401 = vpack.c.b16 %v393, %v392
    %410 = vmatpush.bf16.msra.mxu0 %v401
    %411 = vmatpush.bf16.msra.mxu0 %v400
    %412 = vmatpush.bf16.msra.mxu0 %v399
    %413 = vmatpush.bf16.msra.mxu0 %v398
    %414 = vmatpush.bf16.msra.mxu0 %v397
    %415 = vmatpush.bf16.msra.mxu0 %v396
    %416 = vmatpush.bf16.msra.mxu0 %v395
    %417 = vmatpush.bf16.msra.mxu0 %v394
    %418 = vmatmul.bf16.gmra.mxu0 %v341
    %v419 = vpop.f32.mrf.mxu0
    %v420 = vadd.f32 %v360, %v419
    %v421 = vpop.f32.mrf.mxu0
    %422 = vdwg.mxu0
    %423 = vst [vmem:[%s11] sm:$0xff] %v420
    // Predicated region
    $region82: #{ensemble_critic_forward.1} parent=1 // pred_check
      _
    $region83: #{ensemble_critic_forward.1} parent=1 // pred_check_branch
      %425 = sbr.rel (0) target = $region85
    $region84: #{ensemble_critic_forward.1} parent=1 // pred_region
      _
    $region85: #{ensemble_critic_forward.1} parent=1 // pred_fallthru
      _
    // Predicated region
    $region86: #{ensemble_critic_forward.1} parent=1 // pred_check
      _
    $region87: #{ensemble_critic_forward.1} parent=1 // pred_check_branch
      %427 = sbr.rel (0) target = $region89
    $region88: #{ensemble_critic_forward.1} parent=1 // pred_region
      _
    $region89: #{ensemble_critic_forward.1} parent=1 // pred_fallthru
      _
    %428 = vsyncpa [#allocation3], 1
    %429 = vsyncpa [#allocation5], 1
    %430 = vsyncpa [#allocation8], 1
    %431 = vsyncpa [#allocation11], 1
    %432 = vsyncpa [#allocation14], 1

</llo_original>
